<compile_context>
chip_gen: v7x
topology: tpu7x:2x2x1
jax: 0.10.0
libtpu: 0.0.40
codegen_flags: <defaults>
</compile_context>

<pallas_src>
import functools
import math

import jax
import jax.numpy as jnp
from jax.experimental import pallas as pl
from jax.experimental.pallas import tpu as pltpu

C_HALF = 50    # learned input channels
C_IN = 100     # conv in_channels (50 learned, mirrored to 100)
C_OUT = 128    # conv out_channels


def _conv1x1_symm_kernel(x_ref, w_ref, b_ref, o_ref):
    # x_ref: (2, C_HALF, t_hw)   w_ref: (C_OUT, C_HALF)   b_ref: (C_OUT, 1)
    # o_ref: (C_OUT, t_hw)
    # Weight symmetry: W[:, 0:50] == W[:, 50:100].  Fold the two tile-aligned
    # input planes once (VPU add, free under the HBM roofline) and run a
    # single K=50 MXU matmul.
    xf = x_ref[0] + x_ref[1]                                   # (50, t_hw)
    acc = jnp.dot(w_ref[...], xf, preferred_element_type=jnp.float32)
    o_ref[...] = (acc + b_ref[...]).astype(o_ref.dtype)


def _default_max_hw_tile():
    # Generation-aware cap: v5e has 16 MiB default scoped VMEM and ~0.82 TB/s
    # HBM -> 4096 already amortizes per-step overhead and fits comfortably.
    # v6e/v7x (32 MiB default scoped VMEM): 8192 (~15 MiB double-buffered).
    try:
        kind = jax.devices()[0].device_kind.lower()
    except Exception:
        kind = ""
    if "v5" in kind:
        return 4096
    return 8192


def _pick_hw_tile(hw, n, max_tile):
    """Pick a lane-dense HW tile (multiple of 128 or full extent)."""
    max_tile = max(128, (max_tile // 128) * 128)
    if hw <= max_tile:
        # Full extent is always legal & unmasked.  If N == 1, split hw into
        # two even lane-dense halves so v7x's two TensorCores both get work.
        if n == 1 and hw % 256 == 0:
            return hw // 2
        return hw
    # hw > max_tile: prefer a 128-multiple divisor of hw -> every step gets
    # an unmasked, full-width store (no ragged masked tail).
    for d in range(max_tile, 0, -128):
        if hw % d == 0:
            return d
    # No lane-dense divisor (hw not a multiple of 128): accept a cdiv tail.
    return max_tile


@functools.partial(jax.jit, static_argnames=("max_hw_tile",))
def conv2d_symm_gen_kernel(x_nchw, param, bias, *, max_hw_tile=None):
    """Forward pass of Conv2d_symm_gen_kernel_ml1m.

    x_nchw: (N, 100, H, W) float32
    param : (128, 50, 1, 1) float32 (the learned half of the weight)
    bias  : (128,) float32
    returns (N, 128, H, W) float32
    """
    n, c_in, h, w = x_nchw.shape
    assert c_in == C_IN
    hw = h * w

    if max_hw_tile is None:
        max_hw_tile = _default_max_hw_tile()

    # Free contiguous reshape: NCHW channels split into the two mirrored
    # 50-channel planes, spatial flattened.  No HBM transpose/relayout.
    x_split = x_nchw.reshape(n, 2, C_HALF, hw)
    w2 = param.reshape(C_OUT, C_HALF)        # (128, 50) learned half
    b_col = bias.reshape(C_OUT, 1)

    t_hw = _pick_hw_tile(hw, n, max_hw_tile)
    grid = (n, pl.cdiv(hw, t_hw))

    cost = pl.CostEstimate(
        # Actual MXU work after folding (K = C_HALF), plus the fold adds.
        flops=2 * n * hw * C_HALF * C_OUT + n * hw * C_HALF,
        transcendentals=0,
        bytes_accessed=4 * (n * C_IN * hw + C_OUT * C_HALF + C_OUT
                            + n * C_OUT * hw),
    )

    out = pl.pallas_call(
        _conv1x1_symm_kernel,
        out_shape=jax.ShapeDtypeStruct((n, C_OUT, hw), x_nchw.dtype),
        grid_spec=pltpu.PrefetchScalarGridSpec(
            num_scalar_prefetch=0,
            grid=grid,
            in_specs=[
                # x tile: one batch element, both mirrored channel planes
                # (tile-aligned), one lane-dense HW slab.
                pl.BlockSpec((None, 2, C_HALF, t_hw),
                             lambda b, j: (b, 0, 0, j)),
                # learned weight half: resident across the whole grid
                # (constant index_map -> DMA'd once).
                pl.BlockSpec((C_OUT, C_HALF), lambda b, j: (0, 0)),
                # bias column: resident.
                pl.BlockSpec((C_OUT, 1), lambda b, j: (0, 0)),
            ],
            out_specs=pl.BlockSpec((None, C_OUT, t_hw),
                                   lambda b, j: (b, 0, j)),
        ),
        compiler_params=pltpu.CompilerParams(
            dimension_semantics=("parallel", "parallel")),
        cost_estimate=cost,
    )(x_split, w2, b_col)

    # Free trailing-dim reshape back to NCHW.
    return out.reshape(n, C_OUT, h, w)


if __name__ == "__main__":
    key = jax.random.PRNGKey(0)
    k_param, k_x = jax.random.split(key)

    # Deterministic parameter init mirroring the module:
    # 1/sqrt(356) * randn(128, 50, 1, 1); bias = zeros(128).
    param = (1.0 / math.sqrt(356.0)) * jax.random.normal(
        k_param, (C_OUT, C_HALF, 1, 1), dtype=jnp.float32)
    bias = jnp.zeros((C_OUT,), dtype=jnp.float32)

    # Small input consistent with the module: N=2, C=100, H=W=16.
    x = jax.random.normal(k_x, (2, C_IN, 16, 16), dtype=jnp.float32)

    y = conv2d_symm_gen_kernel(x, param, bias)
    y = jax.block_until_ready(y)

    # Reference check (plain JAX): symmetric 1x1 conv == pointwise linear.
    w_full = jnp.concatenate(
        [param.reshape(C_OUT, C_HALF), param.reshape(C_OUT, C_HALF)], axis=1)
    y_ref = jnp.einsum("nchw,oc->nohw", x, w_full) + bias[None, :, None, None]
    assert y.shape == (2, C_OUT, 16, 16)
    assert jnp.allclose(y, y_ref, atol=1e-4, rtol=1e-4)

    print("KERNEL_OK")
</pallas_src>

<mosaic_0001>
module attributes {stable_mosaic.version = 11 : i64} {
  func.func @_conv1x1_symm_kernel(%arg0: i32, %arg1: i32, %arg2: memref<1x2x50x256xf32, #tpu.memory_space<vmem>>, %arg3: memref<128x50xf32, #tpu.memory_space<vmem>>, %arg4: memref<128x1xf32, #tpu.memory_space<vmem>>, %arg5: memref<1x128x256xf32, #tpu.memory_space<vmem>>) attributes {dimension_semantics = [#tpu.dimension_semantics<parallel>, #tpu.dimension_semantics<parallel>], iteration_bounds = array<i64: 2, 1>, scalar_prefetch = 0 : i64, scratch_operands = 0 : i64, tpu.core_type = #tpu.core_type<tc>, window_params = [{transform_indices = @transform_0, window_bounds = array<i64: 1, 2, 50, 256>}, {pipeline_mode = #tpu.pipeline_mode<synchronous>, transform_indices = @transform_1, window_bounds = array<i64: 128, 50>}, {pipeline_mode = #tpu.pipeline_mode<synchronous>, transform_indices = @transform_2, window_bounds = array<i64: 128, 1>}, {transform_indices = @transform_3, window_bounds = array<i64: 1, 128, 256>}]} {
    %c0 = arith.constant 0 : index
    %c0_0 = arith.constant 0 : index
    %c0_1 = arith.constant 0 : index
    %c0_2 = arith.constant 0 : index
    %0 = vector.load %arg2[%c0, %c0_0, %c0_1, %c0_2] : memref<1x2x50x256xf32, #tpu.memory_space<vmem>>, vector<1x1x50x256xf32>
    %1 = vector.shape_cast %0 : vector<1x1x50x256xf32> to vector<50x256xf32>
    %c0_3 = arith.constant 0 : index
    %c1 = arith.constant 1 : index
    %c0_4 = arith.constant 0 : index
    %c0_5 = arith.constant 0 : index
    %2 = vector.load %arg2[%c0_3, %c1, %c0_4, %c0_5] : memref<1x2x50x256xf32, #tpu.memory_space<vmem>>, vector<1x1x50x256xf32>
    %3 = vector.shape_cast %2 : vector<1x1x50x256xf32> to vector<50x256xf32>
    %4 = arith.addf %1, %3 : vector<50x256xf32>
    %c0_6 = arith.constant 0 : index
    %c0_7 = arith.constant 0 : index
    %5 = vector.load %arg3[%c0_6, %c0_7] : memref<128x50xf32, #tpu.memory_space<vmem>>, vector<128x50xf32>
    %cst = arith.constant dense<0.000000e+00> : vector<128x256xf32>
    %6 = tpu.matmul %5, %4, %cst {dimension_numbers = #tpu.dot_dimension_numbers<[1], [0], [0], [1], [0, 0, 1, 1], [], []>} : vector<128x50xf32>, vector<50x256xf32>, vector<128x256xf32> -> vector<128x256xf32>
    %c0_8 = arith.constant 0 : index
    %c0_9 = arith.constant 0 : index
    %7 = vector.load %arg4[%c0_8, %c0_9] : memref<128x1xf32, #tpu.memory_space<vmem>>, vector<128x1xf32>
    %8 = vector.broadcast %7 : vector<128x1xf32> to vector<128x256xf32>
    %9 = arith.addf %6, %8 : vector<128x256xf32>
    %c0_10 = arith.constant 0 : index
    %c0_11 = arith.constant 0 : index
    %c0_12 = arith.constant 0 : index
    %10 = vector.load %arg5[%c0_10, %c0_11, %c0_12] : memref<1x128x256xf32, #tpu.memory_space<vmem>>, vector<1x128x256xf32>
    %11 = vector.shape_cast %10 : vector<1x128x256xf32> to vector<128x256xf32>
    %12 = vector.shape_cast %9 : vector<128x256xf32> to vector<1x128x256xf32>
    tpu.vector_store %arg5[%c0_10, %c0_11, %c0_12], %12 {strides = array<i32>} : memref<1x128x256xf32, #tpu.memory_space<vmem>>, vector<1x128x256xf32>,
    return
  }
  func.func @transform_0(%arg0: i32, %arg1: i32) -> (i32, i32, i32, i32) {
    %c0_i32 = arith.constant 0 : i32
    %c0_i32_0 = arith.constant 0 : i32
    %c0_i32_1 = arith.constant 0 : i32
    return %arg0, %c0_i32, %c0_i32_0, %arg1 : i32, i32, i32, i32
  }
  func.func @transform_1(%arg0: i32, %arg1: i32) -> (i32, i32) {
    %c0_i32 = arith.constant 0 : i32
    %c0_i32_0 = arith.constant 0 : i32
    %c0_i32_1 = arith.constant 0 : i32
    return %c0_i32, %c0_i32_0 : i32, i32
  }
  func.func @transform_2(%arg0: i32, %arg1: i32) -> (i32, i32) {
    %c0_i32 = arith.constant 0 : i32
    %c0_i32_0 = arith.constant 0 : i32
    %c0_i32_1 = arith.constant 0 : i32
    return %c0_i32, %c0_i32_0 : i32, i32
  }
  func.func @transform_3(%arg0: i32, %arg1: i32) -> (i32, i32, i32) {
    %c0_i32 = arith.constant 0 : i32
    %c0_i32_0 = arith.constant 0 : i32
    return %arg0, %c0_i32, %arg1 : i32, i32, i32
  }
}

</mosaic_0001>

<llo_original>
// kernel: conv2d_symm_gen_kernel.1
$region0: #{conv2d_symm_gen_kernel.1}
  #allocation0 [shape = 'u32[]', space=smem, size = 0x4, offset = 0x4, fixed_abs, tag = 'smem constant byte address 0x4 - core index']
  #allocation1 [shape = 'u32[144,128]{1,0:T(1,128)}', space=vmem, size = 0x12000, scoped, tag = 'internal scratch']
  %s0 = inlined_call_operand.vmem [shape: f32[2,2,50,256], index: 0, kind: input, shape index: {}]
  %s1 = inlined_call_operand.vmem [shape: f32[128,50], index: 1, kind: input, shape index: {}]
  %s2 = inlined_call_operand.vmem [shape: f32[128,1], index: 2, kind: input, shape index: {}]
  %s3 = inlined_call_operand.vmem [shape: f32[2,128,256], index: 3, kind: output, shape index: {}]
  %s4 = sld [smem:[#allocation0]]
  $region45: #{conv2d_symm_gen_kernel.1} parent=0
    _
  %s6 = ssub.s32 1, %s4
  %s7 = scalar_select 0, %s6, %s4
  loop: start=0, step=1, limit=4
  $region2: #{conv2d_symm_gen_kernel.1} parent=0 // loop_pre_header
    _
  $region3: #{conv2d_symm_gen_kernel.1} parent=0 // loop_header
    %s9 = sphi 0, %s13
    %p10 = scmp.ge.s32.totalorder %s9, 4
    %s16 = sphi 0, %s28
    %s17 = sphi 0, %s24
    %s18 = sphi 0, %s16
    %s19 = sphi 0, %s17
    %s20 = sphi 0, %s18
    %s21 = sphi 0, %s19
    %s33 = sphi 0, %s35
    %s36 = sphi 0, %s33
    %s37 = sphi 0, %s36
    %s53 = sphi 0, %s37
    %s57 = sphi 0, %s57
    %s59 = sphi 0, %s57
    %s60 = sphi 0, %s59
    %s74 = sphi 0, %s60
    %s78 = sphi 0, %s78
    %s80 = sphi 0, %s78
    %s81 = sphi 0, %s80
    %s95 = sphi 0, %s81
    %s103 = sphi 0, %s105
    %s106 = sphi 0, %s103
    %s107 = sphi 0, %s106
    %s123 = sphi 0, %s107
  $region4: #{conv2d_symm_gen_kernel.1} parent=0 // loop_header_branch
    %12 = sbr.rel (%p10) target = $region8
  $region5: #{conv2d_symm_gen_kernel.1} parent=0 // loop_body
    %s14 = ssub.s32 %s9, 1
    %s15 = ssub.s32 %s9, 2
    %s22 = sadd.s32 1, %s17
    %p23 = scmp.ge.s32.totalorder %s22, 1
    %s24 = scalar_select %p23, 0, %s22
    %s25 = sadd.s32 1, %s16
    %s26 = scalar_select %p23, %s25, %s16
    %p27 = scmp.ge.s32.totalorder %s26, 2
    %s28 = scalar_select %p27, 0, %s26
    %s29 = ssub.s32 %s16, %s28
    %s30 = ssub.s32 %s17, %s24
    %s31 = sor.u32 %s29, %s30
    %p32 = scmp.eq.s32.totalorder %s31, 0
    %s34 = sadd.s32 %s33, 1
    %s35 = scalar_select %p32, %s33, %s34
    %p38 = pneg %p32
    %p39 = scmp.eq.s32.totalorder %s9, 1
    %p40 = por %p38, %p39
    %p41 = scmp.ne.s32.totalorder %s33, %s36
    %p42 = scmp.eq.s32.totalorder %s9, 0
    %p43 = por %p41, %p42
    %p44 = scmp.ne.s32.totalorder %s33, %s36
    %p45 = scmp.eq.s32.totalorder %s14, 1
    %p46 = por %p44, %p45
    %p47 = scmp.ne.s32.totalorder %s36, %s37
    %p48 = scmp.eq.s32.totalorder %s14, 0
    %p49 = por %p47, %p48
    %p50 = scmp.ne.s32.totalorder %s36, %s37
    %p51 = scmp.eq.s32.totalorder %s15, 1
    %p52 = por %p50, %p51
    %p54 = scmp.ne.s32.totalorder %s37, %s53
    %p55 = scmp.eq.s32.totalorder %s15, 0
    %p56 = por %p54, %p55
    %s58 = sadd.s32 %s57, 1
    %p61 = scmp.eq.s32.totalorder %s9, 1
    %p62 = scmp.ne.s32.totalorder %s57, %s59
    %p63 = scmp.eq.s32.totalorder %s9, 0
    %p64 = por %p62, %p63
    %p65 = scmp.ne.s32.totalorder %s57, %s59
    %p66 = scmp.eq.s32.totalorder %s14, 1
    %p67 = por %p65, %p66
    %p68 = scmp.ne.s32.totalorder %s59, %s60
    %p69 = scmp.eq.s32.totalorder %s14, 0
    %p70 = por %p68, %p69
    %p71 = scmp.ne.s32.totalorder %s59, %s60
    %p72 = scmp.eq.s32.totalorder %s15, 1
    %p73 = por %p71, %p72
    %p75 = scmp.ne.s32.totalorder %s60, %s74
    %p76 = scmp.eq.s32.totalorder %s15, 0
    %p77 = por %p75, %p76
    %s79 = sadd.s32 %s78, 1
    %p82 = scmp.eq.s32.totalorder %s9, 1
    %p83 = scmp.ne.s32.totalorder %s78, %s80
    %p84 = scmp.eq.s32.totalorder %s9, 0
    %p85 = por %p83, %p84
    %p86 = scmp.ne.s32.totalorder %s78, %s80
    %p87 = scmp.eq.s32.totalorder %s14, 1
    %p88 = por %p86, %p87
    %p89 = scmp.ne.s32.totalorder %s80, %s81
    %p90 = scmp.eq.s32.totalorder %s14, 0
    %p91 = por %p89, %p90
    %p92 = scmp.ne.s32.totalorder %s80, %s81
    %p93 = scmp.eq.s32.totalorder %s15, 1
    %p94 = por %p92, %p93
    %p96 = scmp.ne.s32.totalorder %s81, %s95
    %p97 = scmp.eq.s32.totalorder %s15, 0
    %p98 = por %p96, %p97
    %s99 = ssub.s32 %s16, %s28
    %s100 = ssub.s32 %s17, %s24
    %s101 = sor.u32 %s99, %s100
    %p102 = scmp.eq.s32.totalorder %s101, 0
    %s104 = sadd.s32 %s103, 1
    %s105 = scalar_select %p102, %s103, %s104
    %p108 = pneg %p102
    %p109 = scmp.eq.s32.totalorder %s9, 1
    %p110 = por %p108, %p109
    %p111 = scmp.ne.s32.totalorder %s103, %s106
    %p112 = scmp.eq.s32.totalorder %s9, 0
    %p113 = por %p111, %p112
    %p114 = scmp.ne.s32.totalorder %s103, %s106
    %p115 = scmp.eq.s32.totalorder %s14, 1
    %p116 = por %p114, %p115
    %p117 = scmp.ne.s32.totalorder %s106, %s107
    %p118 = scmp.eq.s32.totalorder %s14, 0
    %p119 = por %p117, %p118
    %p120 = scmp.ne.s32.totalorder %s106, %s107
    %p121 = scmp.eq.s32.totalorder %s15, 1
    %p122 = por %p120, %p121
    %p124 = scmp.ne.s32.totalorder %s107, %s123
    %p125 = scmp.eq.s32.totalorder %s15, 0
    %p126 = por %p124, %p125
    %p127 = scmp.le.s32.totalorder 1, %s9
    %p128 = scmp.lt.s32.totalorder %s9, 3
    %p129 = pnand %p127, %p128
    %p130 = pneg %p129
    // Predicated region
    $region9: #{conv2d_symm_gen_kernel.1} parent=5 // pred_check
      _
    $region10: #{conv2d_symm_gen_kernel.1} parent=5 // pred_check_branch
      %132 = sbr.rel (%p129) target = $region12
    $region11: #{conv2d_symm_gen_kernel.1} parent=5 // pred_region
      %s133 = ssub.s32 %s9, 1
      // Predicated region
      $region13: #{conv2d_symm_gen_kernel.1} parent=11 // pred_check
        %p134 = pneg %p70
      $region14: #{conv2d_symm_gen_kernel.1} parent=11 // pred_check_branch
        %136 = sbr.rel (%p134) target = $region16
      $region15: #{conv2d_symm_gen_kernel.1} parent=11 // pred_region
        _
      $region16: #{conv2d_symm_gen_kernel.1} parent=11 // pred_fallthru
        _
      // Predicated region
      $region17: #{conv2d_symm_gen_kernel.1} parent=11 // pred_check
        %p137 = pneg %p91
      $region18: #{conv2d_symm_gen_kernel.1} parent=11 // pred_check_branch
        %139 = sbr.rel (%p137) target = $region20
      $region19: #{conv2d_symm_gen_kernel.1} parent=11 // pred_region
        _
      $region20: #{conv2d_symm_gen_kernel.1} parent=11 // pred_fallthru
        _
    $region12: #{conv2d_symm_gen_kernel.1} parent=5 // pred_fallthru
      _
    %p140 = scmp.lt.s32.totalorder %s9, 2
    // Predicated region
    $region21: #{conv2d_symm_gen_kernel.1} parent=5 // pred_check
      %p141 = pneg %p140
    $region22: #{conv2d_symm_gen_kernel.1} parent=5 // pred_check_branch
      %143 = sbr.rel (%p141) target = $region24
    $region23: #{conv2d_symm_gen_kernel.1} parent=5 // pred_region
      // Predicated region
      $region25: #{conv2d_symm_gen_kernel.1} parent=23 // pred_check
        %p144 = pneg %p43
      $region26: #{conv2d_symm_gen_kernel.1} parent=23 // pred_check_branch
        %146 = sbr.rel (%p144) target = $region28
      $region27: #{conv2d_symm_gen_kernel.1} parent=23 // pred_region
        %s147 = smul.u32 2, %s17
        %p148 = scmp.lt.s32.totalorder %s16, 1
        %s149 = scalar_select %p148, %s16, 1
        %p150 = scmp.lt.s32.totalorder %s147, 1
        %s151 = scalar_select %p150, %s147, 1
        %s152 = smul.addr %s149, 28
        %s153 = sadd.s32 %s151, %s152
        %s154 = smul.addr %s153, 8
        %s155 = scalar_lea.vmem %s0, %s154
        %s156 = smul.u32 2, %s17
      $region28: #{conv2d_symm_gen_kernel.1} parent=23 // pred_fallthru
        _
    $region24: #{conv2d_symm_gen_kernel.1} parent=5 // pred_fallthru
      _
    %p157 = scmp.le.s32.totalorder 1, %s9
    %p158 = scmp.lt.s32.totalorder %s9, 3
    %p159 = pnand %p157, %p158
    %p160 = pneg %p159
    // Predicated region
    $region29: #{conv2d_symm_gen_kernel.1} parent=5 // pred_check
      _
    $region30: #{conv2d_symm_gen_kernel.1} parent=5 // pred_check_branch
      %162 = sbr.rel (%p159) target = $region32
    $region31: #{conv2d_symm_gen_kernel.1} parent=5 // pred_region
      %s163 = ssub.s32 %s9, 1
      %s164 = smul.u32 2, %s19
      %p165 = scmp.lt.s32.totalorder %s18, 1
      %s166 = scalar_select %p165, %s18, 1
      %p167 = scmp.lt.s32.totalorder %s164, 1
      %s168 = scalar_select %p167, %s164, 1
      %s169 = smul.addr %s166, 28
      %s170 = sadd.s32 %s168, %s169
      %s171 = smul.addr %s170, 8
      %s172 = scalar_lea.vmem %s0, %s171
      %p173 = pneg %p49
      %p174 = pneg %p46
      %p175 = pneg %p70
      %p176 = pneg %p67
      %p177 = pneg %p91
      %p178 = pneg %p88
      %p179 = pneg %p119
      %p180 = pneg %p116
      %s181 = smul.u32 2, %s19
      %p182 = scmp.lt.s32.totalorder %s18, 1
      %s183 = scalar_select %p182, %s18, 1
      %p184 = scmp.lt.s32.totalorder %s181, 1
      %s185 = scalar_select %p184, %s181, 1
      %s186 = smul.addr %s183, 32
      %s187 = sadd.s32 %s185, %s186
      %s188 = smul.addr %s187, 8
      %s189 = scalar_lea.vmem %s3, %s188
      %s190 = smul.u32 2, %s19
      %p191 = scmp.lt.s32.totalorder %s18, 1
      %s192 = scalar_select %p191, %s18, 1
      %p193 = scmp.lt.s32.totalorder %s190, 1
      %s194 = scalar_select %p193, %s190, 1
      %s195 = smul.addr %s192, 28
      %s196 = sadd.s32 %s194, %s195
      %s197 = smul.addr %s196, 8
      %s198 = scalar_lea.vmem %s0, %s197
      %s199 = smul.u32 2, %s19
      %s200 = smul.u32 2, %s19
      %p201 = scmp.lt.s32.totalorder %s18, 1
      %s202 = scalar_select %p201, %s18, 1
      %p203 = scmp.lt.s32.totalorder %s200, 1
      %s204 = scalar_select %p203, %s200, 1
      %s205 = smul.addr %s202, 32
      %s206 = sadd.s32 %s204, %s205
      %s207 = smul.addr %s206, 8
      %s208 = scalar_lea.vmem %s3, %s207
      %s209 = smul.u32 2, %s19
      %v210 = vld [vmem:[%s198] sm:$0xff]
      %v211 = vld [vmem:[%s198 + $0x8] sm:$0xff]
      %v212 = vld [vmem:[%s198 + $0x10] sm:$0xff]
      %v213 = vld [vmem:[%s198 + $0x18] sm:$0xff]
      %v214 = vld [vmem:[%s198 + $0x20] sm:$0xff]
      %v215 = vld [vmem:[%s198 + $0x28] sm:$0xff]
      %v216 = vld [vmem:[%s198 + $0x30] sm:$0xff]
      %v217 = vld [vmem:[%s198 + $0x38] sm:$0xff]
      %v218 = vld [vmem:[%s198 + $0x40] sm:$0xff]
      %v219 = vld [vmem:[%s198 + $0x48] sm:$0xff]
      %v220 = vld [vmem:[%s198 + $0x50] sm:$0xff]
      %v221 = vld [vmem:[%s198 + $0x58] sm:$0xff]
      %v222 = vld [vmem:[%s198 + $0x60] sm:$0x3]
      %v223 = vld [vmem:[%s198 + $0x68] sm:$0x3]
      %s224 = scalar_lea.vmem %s198, 112
      %v225 = vld [vmem:[%s224] sm:$0xff]
      %v226 = vld [vmem:[%s224 + $0x8] sm:$0xff]
      %v227 = vld [vmem:[%s224 + $0x10] sm:$0xff]
      %v228 = vld [vmem:[%s224 + $0x18] sm:$0xff]
      %v229 = vld [vmem:[%s224 + $0x20] sm:$0xff]
      %v230 = vld [vmem:[%s224 + $0x28] sm:$0xff]
      %v231 = vld [vmem:[%s224 + $0x30] sm:$0xff]
      %v232 = vld [vmem:[%s224 + $0x38] sm:$0xff]
      %v233 = vld [vmem:[%s224 + $0x40] sm:$0xff]
      %v234 = vld [vmem:[%s224 + $0x48] sm:$0xff]
      %v235 = vld [vmem:[%s224 + $0x50] sm:$0xff]
      %v236 = vld [vmem:[%s224 + $0x58] sm:$0xff]
      %v237 = vld [vmem:[%s224 + $0x60] sm:$0x3]
      %v238 = vld [vmem:[%s224 + $0x68] sm:$0x3]
      %v239 = vadd.f32 %v210, %v225
      %v240 = vadd.f32 %v211, %v226
      %v241 = vadd.f32 %v212, %v227
      %v242 = vadd.f32 %v213, %v228
      %v243 = vadd.f32 %v214, %v229
      %v244 = vadd.f32 %v215, %v230
      %v245 = vadd.f32 %v216, %v231
      %v246 = vadd.f32 %v217, %v232
      %v247 = vadd.f32 %v218, %v233
      %v248 = vadd.f32 %v219, %v234
      %v249 = vadd.f32 %v220, %v235
      %v250 = vadd.f32 %v221, %v236
      %v251 = vadd.f32 %v222, %v237
      %v252 = vadd.f32 %v223, %v238
      %v253 = vld [vmem:[%s1] sm:$0xff]
      %v254 = vld [vmem:[%s1 + $0x8] sm:$0xff]
      %v255 = vld [vmem:[%s1 + $0x10] sm:$0xff]
      %v256 = vld [vmem:[%s1 + $0x18] sm:$0xff]
      %v257 = vld [vmem:[%s1 + $0x20] sm:$0xff]
      %v258 = vld [vmem:[%s1 + $0x28] sm:$0xff]
      %v259 = vld [vmem:[%s1 + $0x30] sm:$0xff]
      %v260 = vld [vmem:[%s1 + $0x38] sm:$0xff]
      %v261 = vld [vmem:[%s1 + $0x40] sm:$0xff]
      %v262 = vld [vmem:[%s1 + $0x48] sm:$0xff]
      %v263 = vld [vmem:[%s1 + $0x50] sm:$0xff]
      %v264 = vld [vmem:[%s1 + $0x58] sm:$0xff]
      %v265 = vld [vmem:[%s1 + $0x60] sm:$0xff]
      %v266 = vld [vmem:[%s1 + $0x68] sm:$0xff]
      %v267 = vld [vmem:[%s1 + $0x70] sm:$0xff]
      %v268 = vld [vmem:[%s1 + $0x78] sm:$0xff]
      %v269 = vld [vmem:[%s2] sm:$0xff]
      %v270 = vld [vmem:[%s2 + $0x8] sm:$0xff]
      %v271 = vld [vmem:[%s2 + $0x10] sm:$0xff]
      %v272 = vld [vmem:[%s2 + $0x18] sm:$0xff]
      %v273 = vld [vmem:[%s2 + $0x20] sm:$0xff]
      %v274 = vld [vmem:[%s2 + $0x28] sm:$0xff]
      %v275 = vld [vmem:[%s2 + $0x30] sm:$0xff]
      %v276 = vld [vmem:[%s2 + $0x38] sm:$0xff]
      %v277 = vld [vmem:[%s2 + $0x40] sm:$0xff]
      %v278 = vld [vmem:[%s2 + $0x48] sm:$0xff]
      %v279 = vld [vmem:[%s2 + $0x50] sm:$0xff]
      %v280 = vld [vmem:[%s2 + $0x58] sm:$0xff]
      %v281 = vld [vmem:[%s2 + $0x60] sm:$0xff]
      %v282 = vld [vmem:[%s2 + $0x68] sm:$0xff]
      %v283 = vld [vmem:[%s2 + $0x70] sm:$0xff]
      %v284 = vld [vmem:[%s2 + $0x78] sm:$0xff]
      %286 = vset.pattern.permute.xlu0 0
      %287 = vperm.xlu0 %286, %v269
      %v288 = vpop.permute.xlu0 %287
      %291 = vset.pattern.permute.xlu0 0
      %292 = vperm.xlu0 %291, %v270
      %v293 = vpop.permute.xlu0 %292
      %296 = vset.pattern.permute.xlu0 0
      %297 = vperm.xlu0 %296, %v271
      %v298 = vpop.permute.xlu0 %297
      %301 = vset.pattern.permute.xlu0 0
      %302 = vperm.xlu0 %301, %v272
      %v303 = vpop.permute.xlu0 %302
      %306 = vset.pattern.permute.xlu0 0
      %307 = vperm.xlu0 %306, %v273
      %v308 = vpop.permute.xlu0 %307
      %311 = vset.pattern.permute.xlu0 0
      %312 = vperm.xlu0 %311, %v274
      %v313 = vpop.permute.xlu0 %312
      %316 = vset.pattern.permute.xlu0 0
      %317 = vperm.xlu0 %316, %v275
      %v318 = vpop.permute.xlu0 %317
      %321 = vset.pattern.permute.xlu0 0
      %322 = vperm.xlu0 %321, %v276
      %v323 = vpop.permute.xlu0 %322
      %326 = vset.pattern.permute.xlu0 0
      %327 = vperm.xlu0 %326, %v277
      %v328 = vpop.permute.xlu0 %327
      %331 = vset.pattern.permute.xlu0 0
      %332 = vperm.xlu0 %331, %v278
      %v333 = vpop.permute.xlu0 %332
      %336 = vset.pattern.permute.xlu0 0
      %337 = vperm.xlu0 %336, %v279
      %v338 = vpop.permute.xlu0 %337
      %341 = vset.pattern.permute.xlu0 0
      %342 = vperm.xlu0 %341, %v280
      %v343 = vpop.permute.xlu0 %342
      %346 = vset.pattern.permute.xlu0 0
      %347 = vperm.xlu0 %346, %v281
      %v348 = vpop.permute.xlu0 %347
      %351 = vset.pattern.permute.xlu0 0
      %352 = vperm.xlu0 %351, %v282
      %v353 = vpop.permute.xlu0 %352
      %356 = vset.pattern.permute.xlu0 0
      %357 = vperm.xlu0 %356, %v283
      %v358 = vpop.permute.xlu0 %357
      %361 = vset.pattern.permute.xlu0 0
      %362 = vperm.xlu0 %361, %v284
      %v363 = vpop.permute.xlu0 %362
      %vm365 = vcmask 408576
      %v367 = vsel %vm365, %v253, 0
      %v370 = vsel %vm365, %v254, 0
      %v373 = vsel %vm365, %v255, 0
      %v376 = vsel %vm365, %v256, 0
      %v379 = vsel %vm365, %v257, 0
      %v382 = vsel %vm365, %v258, 0
      %v385 = vsel %vm365, %v259, 0
      %v388 = vsel %vm365, %v260, 0
      %v391 = vsel %vm365, %v261, 0
      %v394 = vsel %vm365, %v262, 0
      %v397 = vsel %vm365, %v263, 0
      %v400 = vsel %vm365, %v264, 0
      %v403 = vsel %vm365, %v265, 0
      %v406 = vsel %vm365, %v266, 0
      %v409 = vsel %vm365, %v267, 0
      %v412 = vsel %vm365, %v268, 0
      %vm414 = vcmask 1041408
      %v416 = vsel %vm414, %v251, 0
      %v419 = vsel %vm414, %v252, 0
      %421 = vmatprep.subr.mxu0 %v240
      %422 = vmatpush1.msra.mxu0 %v239
      %423 = vmatprep.subr.mxu0 %v242
      %424 = vmatpush1.msra.mxu0 %v241
      %425 = vmatprep.subr.mxu0 %v244
      %426 = vmatpush1.msra.mxu0 %v243
      %427 = vmatprep.subr.mxu0 %v246
      %428 = vmatpush1.msra.mxu0 %v245
      %429 = vmatprep.subr.mxu0 %v248
      %430 = vmatpush1.msra.mxu0 %v247
      %431 = vmatprep.subr.mxu0 %v250
      %432 = vmatpush1.msra.mxu0 %v249
      %433 = vmatprep.subr.mxu0 %v419
      %434 = vmatpush1.msra.mxu0 %v416
      %435 = vmatprep.subr.mxu0 0.0
      %436 = vmatpush1.msra.mxu0 0.0
      %437 = vmatprep.subr.mxu0 0.0
      %438 = vmatpush1.msra.mxu0 0.0
      %439 = vmatprep.subr.mxu0 0.0
      %440 = vmatpush1.msra.mxu0 0.0
      %441 = vmatprep.subr.mxu0 0.0
      %442 = vmatpush1.msra.mxu0 0.0
      %443 = vmatprep.subr.mxu0 0.0
      %444 = vmatpush1.msra.mxu0 0.0
      %445 = vmatprep.subr.mxu0 0.0
      %446 = vmatpush1.msra.mxu0 0.0
      %447 = vmatprep.subr.mxu0 0.0
      %448 = vmatpush1.msra.mxu0 0.0
      %449 = vmatprep.subr.mxu0 0.0
      %450 = vmatpush1.msra.mxu0 0.0
      %451 = vmatprep.subr.mxu0 0.0
      %452 = vmatpush1.msra.mxu0 0.0
      %453 = vmatprep.subr.mxu0 0.0
      %454 = vmatpush1.msra.mxu0 0.0
      %455 = vmatprep.subr.mxu0 0.0
      %456 = vmatpush1.msra.mxu0 0.0
      %457 = vmatprep.subr.mxu0 0.0
      %458 = vmatpush1.msra.mxu0 0.0
      %459 = vmatprep.subr.mxu0 0.0
      %460 = vmatpush1.msra.mxu0 0.0
      %461 = vmatprep.subr.mxu0 0.0
      %462 = vmatpush1.msra.mxu0 0.0
      %463 = vmatprep.subr.mxu0 0.0
      %464 = vmatpush1.msra.mxu0 0.0
      %465 = vmatprep.subr.mxu0 0.0
      %466 = vmatpush1.msra.mxu0 0.0
      %467 = vmatprep.subr.mxu0 0.0
      %468 = vmatpush1.msra.mxu0 0.0
      %469 = vmatprep.subr.mxu0 0.0
      %470 = vmatpush1.msra.mxu0 0.0
      %471 = vmatprep.subr.mxu0 0.0
      %472 = vmatpush1.msra.mxu0 0.0
      %473 = vmatprep.subr.mxu0 0.0
      %474 = vmatpush1.msra.mxu0 0.0
      %475 = vmatprep.subr.mxu0 0.0
      %476 = vmatpush1.msra.mxu0 0.0
      %477 = vmatprep.subr.mxu0 0.0
      %478 = vmatpush1.msra.mxu0 0.0
      %479 = vmatprep.subr.mxu0 0.0
      %480 = vmatpush1.msra.mxu0 0.0
      %481 = vmatprep.subr.mxu0 0.0
      %482 = vmatpush1.msra.mxu0 0.0
      %483 = vmatprep.subr.mxu0 0.0
      %484 = vmatpush1.msra.mxu0 0.0
      %485 = vmatprep.mubr.f32.mxu0 0.0
      %486 = vmatmul.mubr.f32.gmra.mrb[0].mxu0 %v367
      %v487 = vpop.f32.mrb[0].mxu0
      %v488 = vadd.f32 %v288, %v487
      %v489 = vpop.f32.mrb[0].mxu0
      %v490 = vadd.f32 %v288, %v489
      %491 = vmatprep.mubr.f32.mxu0 0.0
      %492 = vmatmul.mubr.f32.gmra.mrb[0].mxu0 %v370
      %v493 = vpop.f32.mrb[0].mxu0
      %v494 = vadd.f32 %v293, %v493
      %v495 = vpop.f32.mrb[0].mxu0
      %v496 = vadd.f32 %v293, %v495
      %497 = vmatprep.mubr.f32.mxu0 0.0
      %498 = vmatmul.mubr.f32.gmra.mrb[0].mxu0 %v373
      %v499 = vpop.f32.mrb[0].mxu0
      %v500 = vadd.f32 %v298, %v499
      %v501 = vpop.f32.mrb[0].mxu0
      %v502 = vadd.f32 %v298, %v501
      %503 = vmatprep.mubr.f32.mxu0 0.0
      %504 = vmatmul.mubr.f32.gmra.mrb[0].mxu0 %v376
      %v505 = vpop.f32.mrb[0].mxu0
      %v506 = vadd.f32 %v303, %v505
      %v507 = vpop.f32.mrb[0].mxu0
      %v508 = vadd.f32 %v303, %v507
      %509 = vmatprep.mubr.f32.mxu0 0.0
      %510 = vmatmul.mubr.f32.gmra.mrb[0].mxu0 %v379
      %v511 = vpop.f32.mrb[0].mxu0
      %v512 = vadd.f32 %v308, %v511
      %v513 = vpop.f32.mrb[0].mxu0
      %v514 = vadd.f32 %v308, %v513
      %515 = vmatprep.mubr.f32.mxu0 0.0
      %516 = vmatmul.mubr.f32.gmra.mrb[0].mxu0 %v382
      %v517 = vpop.f32.mrb[0].mxu0
      %v518 = vadd.f32 %v313, %v517
      %v519 = vpop.f32.mrb[0].mxu0
      %v520 = vadd.f32 %v313, %v519
      %521 = vmatprep.mubr.f32.mxu0 0.0
      %522 = vmatmul.mubr.f32.gmra.mrb[0].mxu0 %v385
      %v523 = vpop.f32.mrb[0].mxu0
      %v524 = vadd.f32 %v318, %v523
      %v525 = vpop.f32.mrb[0].mxu0
      %v526 = vadd.f32 %v318, %v525
      %527 = vmatprep.mubr.f32.mxu0 0.0
      %528 = vmatmul.mubr.f32.gmra.mrb[0].mxu0 %v388
      %v529 = vpop.f32.mrb[0].mxu0
      %v530 = vadd.f32 %v323, %v529
      %v531 = vpop.f32.mrb[0].mxu0
      %v532 = vadd.f32 %v323, %v531
      %533 = vmatprep.mubr.f32.mxu0 0.0
      %534 = vmatmul.mubr.f32.gmra.mrb[0].mxu0 %v391
      %v535 = vpop.f32.mrb[0].mxu0
      %v536 = vadd.f32 %v328, %v535
      %v537 = vpop.f32.mrb[0].mxu0
      %v538 = vadd.f32 %v328, %v537
      %539 = vmatprep.mubr.f32.mxu0 0.0
      %540 = vmatmul.mubr.f32.gmra.mrb[0].mxu0 %v394
      %v541 = vpop.f32.mrb[0].mxu0
      %v542 = vadd.f32 %v333, %v541
      %v543 = vpop.f32.mrb[0].mxu0
      %v544 = vadd.f32 %v333, %v543
      %545 = vmatprep.mubr.f32.mxu0 0.0
      %546 = vmatmul.mubr.f32.gmra.mrb[0].mxu0 %v397
      %v547 = vpop.f32.mrb[0].mxu0
      %v548 = vadd.f32 %v338, %v547
      %v549 = vpop.f32.mrb[0].mxu0
      %v550 = vadd.f32 %v338, %v549
      %551 = vmatprep.mubr.f32.mxu0 0.0
      %552 = vmatmul.mubr.f32.gmra.mrb[0].mxu0 %v400
      %v553 = vpop.f32.mrb[0].mxu0
      %v554 = vadd.f32 %v343, %v553
      %v555 = vpop.f32.mrb[0].mxu0
      %v556 = vadd.f32 %v343, %v555
      %557 = vmatprep.mubr.f32.mxu0 0.0
      %558 = vmatmul.mubr.f32.gmra.mrb[0].mxu0 %v403
      %v559 = vpop.f32.mrb[0].mxu0
      %v560 = vadd.f32 %v348, %v559
      %v561 = vpop.f32.mrb[0].mxu0
      %v562 = vadd.f32 %v348, %v561
      %563 = vmatprep.mubr.f32.mxu0 0.0
      %564 = vmatmul.mubr.f32.gmra.mrb[0].mxu0 %v406
      %v565 = vpop.f32.mrb[0].mxu0
      %v566 = vadd.f32 %v353, %v565
      %v567 = vpop.f32.mrb[0].mxu0
      %v568 = vadd.f32 %v353, %v567
      %569 = vmatprep.mubr.f32.mxu0 0.0
      %570 = vmatmul.mubr.f32.gmra.mrb[0].mxu0 %v409
      %v571 = vpop.f32.mrb[0].mxu0
      %v572 = vadd.f32 %v358, %v571
      %v573 = vpop.f32.mrb[0].mxu0
      %v574 = vadd.f32 %v358, %v573
      %575 = vmatprep.mubr.f32.mxu0 0.0
      %576 = vmatmul.mubr.f32.gmra.mrb[0].mxu0 %v412
      %v577 = vpop.f32.mrb[0].mxu0
      %v578 = vadd.f32 %v363, %v577
      %v579 = vpop.f32.mrb[0].mxu0
      %v580 = vadd.f32 %v363, %v579
      %581 = vdwg.mxu0
      %582 = vst [vmem:[%s208] sm:$0xff] %v488
      %583 = vst [vmem:[%s208 + $0x8] sm:$0xff] %v490
      %584 = vst [vmem:[%s208 + $0x10] sm:$0xff] %v494
      %585 = vst [vmem:[%s208 + $0x18] sm:$0xff] %v496
      %586 = vst [vmem:[%s208 + $0x20] sm:$0xff] %v500
      %587 = vst [vmem:[%s208 + $0x28] sm:$0xff] %v502
      %588 = vst [vmem:[%s208 + $0x30] sm:$0xff] %v506
      %589 = vst [vmem:[%s208 + $0x38] sm:$0xff] %v508
      %590 = vst [vmem:[%s208 + $0x40] sm:$0xff] %v512
      %591 = vst [vmem:[%s208 + $0x48] sm:$0xff] %v514
      %592 = vst [vmem:[%s208 + $0x50] sm:$0xff] %v518
      %593 = vst [vmem:[%s208 + $0x58] sm:$0xff] %v520
      %594 = vst [vmem:[%s208 + $0x60] sm:$0xff] %v524
      %595 = vst [vmem:[%s208 + $0x68] sm:$0xff] %v526
      %596 = vst [vmem:[%s208 + $0x70] sm:$0xff] %v530
      %597 = vst [vmem:[%s208 + $0x78] sm:$0xff] %v532
      %598 = vst [vmem:[%s208 + $0x80] sm:$0xff] %v536
      %599 = vst [vmem:[%s208 + $0x88] sm:$0xff] %v538
      %600 = vst [vmem:[%s208 + $0x90] sm:$0xff] %v542
      %601 = vst [vmem:[%s208 + $0x98] sm:$0xff] %v544
      %602 = vst [vmem:[%s208 + $0xa0] sm:$0xff] %v548
      %603 = vst [vmem:[%s208 + $0xa8] sm:$0xff] %v550
      %604 = vst [vmem:[%s208 + $0xb0] sm:$0xff] %v554
      %605 = vst [vmem:[%s208 + $0xb8] sm:$0xff] %v556
      %606 = vst [vmem:[%s208 + $0xc0] sm:$0xff] %v560
      %607 = vst [vmem:[%s208 + $0xc8] sm:$0xff] %v562
      %608 = vst [vmem:[%s208 + $0xd0] sm:$0xff] %v566
      %609 = vst [vmem:[%s208 + $0xd8] sm:$0xff] %v568
      %610 = vst [vmem:[%s208 + $0xe0] sm:$0xff] %v572
      %611 = vst [vmem:[%s208 + $0xe8] sm:$0xff] %v574
      %612 = vst [vmem:[%s208 + $0xf0] sm:$0xff] %v578
      %613 = vst [vmem:[%s208 + $0xf8] sm:$0xff] %v580
      %s614 = smul.u32 2, %s19
      %p615 = scmp.lt.s32.totalorder %s18, 1
      %s616 = scalar_select %p615, %s18, 1
      %p617 = scmp.lt.s32.totalorder %s614, 1
      %s618 = scalar_select %p617, %s614, 1
      %s619 = smul.addr %s616, 32
      %s620 = sadd.s32 %s618, %s619
      %s621 = smul.addr %s620, 8
      %s622 = scalar_lea.vmem %s3, %s621
      // Predicated region
      $region33: #{conv2d_symm_gen_kernel.1} parent=31 // pred_check
        %p623 = pneg %p116
      $region34: #{conv2d_symm_gen_kernel.1} parent=31 // pred_check_branch
        %625 = sbr.rel (%p623) target = $region36
      $region35: #{conv2d_symm_gen_kernel.1} parent=31 // pred_region
        %s626 = smul.u32 2, %s19
      $region36: #{conv2d_symm_gen_kernel.1} parent=31 // pred_fallthru
        _
    $region32: #{conv2d_symm_gen_kernel.1} parent=5 // pred_fallthru
      _
    %p627 = scmp.le.s32.totalorder 2, %s9
    // Predicated region
    $region37: #{conv2d_symm_gen_kernel.1} parent=5 // pred_check
      %p628 = pneg %p627
    $region38: #{conv2d_symm_gen_kernel.1} parent=5 // pred_check_branch
      %630 = sbr.rel (%p628) target = $region40
    $region39: #{conv2d_symm_gen_kernel.1} parent=5 // pred_region
      %s631 = ssub.s32 %s9, 2
      // Predicated region
      $region41: #{conv2d_symm_gen_kernel.1} parent=39 // pred_check
        %p632 = pneg %p122
      $region42: #{conv2d_symm_gen_kernel.1} parent=39 // pred_check_branch
        %634 = sbr.rel (%p632) target = $region44
      $region43: #{conv2d_symm_gen_kernel.1} parent=39 // pred_region
        %s635 = smul.u32 2, %s21
        %p636 = scmp.lt.s32.totalorder %s20, 1
        %s637 = scalar_select %p636, %s20, 1
        %p638 = scmp.lt.s32.totalorder %s635, 1
        %s639 = scalar_select %p638, %s635, 1
        %s640 = smul.addr %s637, 32
        %s641 = sadd.s32 %s639, %s640
        %s642 = smul.addr %s641, 8
        %s643 = scalar_lea.vmem %s3, %s642
      $region44: #{conv2d_symm_gen_kernel.1} parent=39 // pred_fallthru
        _
    $region40: #{conv2d_symm_gen_kernel.1} parent=5 // pred_fallthru
      _
  $region6: #{conv2d_symm_gen_kernel.1} parent=0 // loop_footer
    %s13 = sadd.s32 1, %s9
  $region7: #{conv2d_symm_gen_kernel.1} parent=0 // loop_footer_branch
    %8 = sbr.rel target = $region3
  $region8: #{conv2d_symm_gen_kernel.1} parent=0 // loop_exit
    _

</llo_original>
